<compile_context>
chip_gen: v7x
topology: tpu7x:2x2x1
jax: 0.10.0
libtpu: 0.0.40
codegen_flags: <defaults>
</compile_context>

<pallas_src>
import functools

import jax
import jax.numpy as jnp
from jax.experimental import pallas as pl
from jax.experimental.pallas import tpu as pltpu


def _subgraph_kernel(x_ref, cl_ref, w_ref, b_ref, g_ref, beta_ref, out_ref, *,
                     k_pad):
    bt, n, cin = x_ref.shape
    h_dim = w_ref.shape[1]

    # ---- Linear + LayerNorm + ReLU on the folded (bt*N, Cin) block: one MXU call.
    x2 = x_ref[...].reshape(bt * n, cin)                                # (bt*N, Cin)
    h = jnp.dot(x2, w_ref[...], preferred_element_type=jnp.float32)
    h = h + b_ref[...]                                                  # (bt*N, H)

    mean = jnp.mean(h, axis=-1, keepdims=True)
    var = jnp.mean(h * h, axis=-1, keepdims=True) - mean * mean         # one pass
    hn = (h - mean) * jax.lax.rsqrt(var + jnp.float32(1e-5))
    y2 = jnp.maximum(hn * g_ref[...] + beta_ref[...], jnp.float32(0.0))  # (bt*N, H)

    # ---- Per-batch cluster-max table + one-hot MXU gather-back, fused-concat store.
    k_iota = jax.lax.broadcasted_iota(jnp.int32, (n, k_pad), 1)          # hoisted

    for b in range(bt):                         # bt is small and static
        y_b = y2[b * n:(b + 1) * n, :]          # (N, H) live value (no ref re-read)
        cl_b = cl_ref[b]                        # (N, 1) int32

        # cluster-max table: one masked sublane max-reduce per cluster id.
        # 0-fill is safe because y >= 0 after ReLU.
        rows = []
        for k in range(k_pad):                  # K is small and static
            mk = cl_b == k                      # (N, 1)
            rows.append(jnp.max(jnp.where(mk, y_b, jnp.float32(0.0)),
                                axis=0, keepdims=True))                  # (1, H)
        cmax = jnp.concatenate(rows, axis=0)                             # (K, H)

        # gather back: each one-hot row selects exactly one cmax row (MXU matmul).
        onehot = (cl_b == k_iota).astype(jnp.float32)                    # (N, K)
        aggr_b = jnp.dot(onehot, cmax,
                         preferred_element_type=jnp.float32)             # (N, H)

        # fused concat: single (N, 2H) store per batch, no wrapper-side concat.
        out_ref[b] = jnp.concatenate([y_b, aggr_b], axis=-1).astype(out_ref.dtype)


def _pick_bt(B, N, Cin, H, vmem_budget=8 << 20):
    """Largest divisor of B that keeps >= 2 grid steps (v7x megacore) and fits VMEM."""
    best = 1
    for d in range(1, min(B, 32) + 1):
        if B % d != 0:
            continue
        if B >= 2 and (B // d) < 2:
            continue                       # keep work for both v7x TensorCores
        step_bytes = 4 * d * N * (Cin + 1 + 2 * H) * 2 + 4 * d * N * 4 * H
        if step_bytes > vmem_budget:
            continue
        best = d
    return best


def subgraph_layer(x, cluster, w, b, gamma, beta, *, num_clusters=None, bt=None):
    """x: (B, N, Cin) f32, cluster: (B, N) int, w: (Cin, H), b/gamma/beta: (H,)."""
    B, N, Cin = x.shape
    H = w.shape[1]
    assert N % 8 == 0, "node count must be a multiple of 8 (sublane tile)"

    if num_clusters is None:
        # Needs concrete cluster ids; pass num_clusters explicitly when under jit.
        num_clusters = int(jax.device_get(jnp.max(cluster))) + 1
    k_pad = max(8, ((int(num_clusters) + 7) // 8) * 8)

    if bt is None:
        bt = _pick_bt(B, N, Cin, H)
    assert B % bt == 0

    cl_col = cluster[:, :, None].astype(jnp.int32)          # (B, N, 1)
    b2 = b.reshape(1, H).astype(jnp.float32)
    g2 = gamma.reshape(1, H).astype(jnp.float32)
    beta2 = beta.reshape(1, H).astype(jnp.float32)

    # Explicit VMEM budget: double-buffered in/out blocks + live intermediates,
    # with headroom; capped at v7x's 32 MiB scoped default.
    blk_bytes = 4 * bt * N * (Cin + 1 + 2 * H)
    interm_bytes = 4 * (bt * N * 4 * H + k_pad * H + N * k_pad)
    vmem_limit = int(min(max(2 * blk_bytes + interm_bytes + (8 << 20), 16 << 20),
                         32 << 20))

    out = pl.pallas_call(
        functools.partial(_subgraph_kernel, k_pad=k_pad),
        out_shape=jax.ShapeDtypeStruct((B, N, 2 * H), jnp.float32),
        grid_spec=pltpu.PrefetchScalarGridSpec(
            num_scalar_prefetch=0,
            grid=(B // bt,),
            in_specs=[
                pl.BlockSpec((bt, N, Cin), lambda i: (i, 0, 0)),    # x
                pl.BlockSpec((bt, N, 1), lambda i: (i, 0, 0)),      # cluster (col)
                pl.BlockSpec((Cin, H), lambda i: (0, 0)),           # W
                pl.BlockSpec((1, H), lambda i: (0, 0)),             # bias
                pl.BlockSpec((1, H), lambda i: (0, 0)),             # LN gamma
                pl.BlockSpec((1, H), lambda i: (0, 0)),             # LN beta
            ],
            out_specs=pl.BlockSpec((bt, N, 2 * H), lambda i: (i, 0, 0)),
        ),
        compiler_params=pltpu.CompilerParams(
            dimension_semantics=("parallel",),
            vmem_limit_bytes=vmem_limit),
    )(x, cl_col, w, b2, g2, beta2)
    return out


def _reference(x, cluster, w, b, gamma, beta):
    h = x @ w + b
    mean = h.mean(-1, keepdims=True)
    var = ((h - mean) ** 2).mean(-1, keepdims=True)
    hn = (h - mean) / jnp.sqrt(var + 1e-5) * gamma + beta
    y = jnp.maximum(hn, 0.0)
    mask = cluster[:, :, None] == cluster[:, None, :]                # (B, N, N)
    aggr = jnp.max(jnp.where(mask[..., None], y[:, None, :, :], -jnp.inf), axis=2)
    return jnp.concatenate([y, aggr], axis=-1)


if __name__ == "__main__":
    B, N, Cin, H = 2, 8, 4, 32

    key = jax.random.PRNGKey(0)
    kx, kc, kw, kb = jax.random.split(key, 4)

    x = jax.random.normal(kx, (B, N, Cin), dtype=jnp.float32)
    cluster = jax.random.randint(kc, (B, N), 0, 3, dtype=jnp.int32)

    # Deterministic parameter init (nn.Linear(Cin, H) + nn.LayerNorm(H) shapes).
    w = jax.random.normal(kw, (Cin, H), dtype=jnp.float32) * (1.0 / jnp.sqrt(Cin))
    b = jax.random.normal(kb, (H,), dtype=jnp.float32) * 0.1
    gamma = jnp.ones((H,), dtype=jnp.float32)
    beta = jnp.zeros((H,), dtype=jnp.float32)

    out = subgraph_layer(x, cluster, w, b, gamma, beta)
    out = jax.block_until_ready(out)

    ref = _reference(x, cluster, w, b, gamma, beta)
    assert out.shape == (B, N, 2 * H)
    assert jnp.allclose(out, ref, atol=1e-4, rtol=1e-4), "mismatch vs reference"

    print("KERNEL_OK")
</pallas_src>

<mosaic_0001>
module attributes {stable_mosaic.version = 11 : i64} {
  func.func @_subgraph_kernel(%arg0: i32, %arg1: memref<1x8x4xf32, #tpu.memory_space<vmem>>, %arg2: memref<1x8x1xi32, #tpu.memory_space<vmem>>, %arg3: memref<4x32xf32, #tpu.memory_space<vmem>>, %arg4: memref<1x32xf32, #tpu.memory_space<vmem>>, %arg5: memref<1x32xf32, #tpu.memory_space<vmem>>, %arg6: memref<1x32xf32, #tpu.memory_space<vmem>>, %arg7: memref<1x8x64xf32, #tpu.memory_space<vmem>>) attributes {dimension_semantics = [#tpu.dimension_semantics<parallel>], iteration_bounds = array<i64: 2>, scalar_prefetch = 0 : i64, scratch_operands = 0 : i64, tpu.core_type = #tpu.core_type<tc>, window_params = [{transform_indices = @transform_0, window_bounds = array<i64: 1, 8, 4>}, {transform_indices = @transform_1, window_bounds = array<i64: 1, 8, 1>}, {pipeline_mode = #tpu.pipeline_mode<synchronous>, transform_indices = @transform_2, window_bounds = array<i64: 4, 32>}, {pipeline_mode = #tpu.pipeline_mode<synchronous>, transform_indices = @transform_3, window_bounds = array<i64: 1, 32>}, {pipeline_mode = #tpu.pipeline_mode<synchronous>, transform_indices = @transform_4, window_bounds = array<i64: 1, 32>}, {pipeline_mode = #tpu.pipeline_mode<synchronous>, transform_indices = @transform_5, window_bounds = array<i64: 1, 32>}, {transform_indices = @transform_6, window_bounds = array<i64: 1, 8, 64>}]} {
    %c0 = arith.constant 0 : index
    %c0_0 = arith.constant 0 : index
    %c0_1 = arith.constant 0 : index
    %0 = vector.load %arg1[%c0, %c0_0, %c0_1] : memref<1x8x4xf32, #tpu.memory_space<vmem>>, vector<1x8x4xf32>
    %1 = vector.shape_cast %0 : vector<1x8x4xf32> to vector<8x4xf32>
    %c0_2 = arith.constant 0 : index
    %c0_3 = arith.constant 0 : index
    %2 = vector.load %arg3[%c0_2, %c0_3] : memref<4x32xf32, #tpu.memory_space<vmem>>, vector<4x32xf32>
    %cst = arith.constant dense<0.000000e+00> : vector<8x32xf32>
    %3 = tpu.matmul %1, %2, %cst {dimension_numbers = #tpu.dot_dimension_numbers<[1], [0], [0], [1], [0, 0, 1, 1], [], []>} : vector<8x4xf32>, vector<4x32xf32>, vector<8x32xf32> -> vector<8x32xf32>
    %c0_4 = arith.constant 0 : index
    %c0_5 = arith.constant 0 : index
    %4 = vector.load %arg4[%c0_4, %c0_5] : memref<1x32xf32, #tpu.memory_space<vmem>>, vector<1x32xf32>
    %5 = vector.broadcast %4 : vector<1x32xf32> to vector<8x32xf32>
    %6 = arith.addf %3, %5 : vector<8x32xf32>
    %cst_6 = arith.constant dense<0.000000e+00> : vector<8xf32>
    %7 = vector.multi_reduction <add>, %6, %cst_6 [1] : vector<8x32xf32> to vector<8xf32>
    %8 = vector.shape_cast %7 : vector<8xf32> to vector<8x1xf32>
    %cst_7 = arith.constant 3.200000e+01 : f32
    %9 = vector.broadcast %cst_7 : f32 to vector<8x1xf32>
    %10 = arith.divf %8, %9 : vector<8x1xf32>
    %11 = arith.mulf %6, %6 : vector<8x32xf32>
    %cst_8 = arith.constant dense<0.000000e+00> : vector<8xf32>
    %12 = vector.multi_reduction <add>, %11, %cst_8 [1] : vector<8x32xf32> to vector<8xf32>
    %13 = vector.shape_cast %12 : vector<8xf32> to vector<8x1xf32>
    %cst_9 = arith.constant 3.200000e+01 : f32
    %14 = vector.broadcast %cst_9 : f32 to vector<8x1xf32>
    %15 = arith.divf %13, %14 : vector<8x1xf32>
    %16 = arith.mulf %10, %10 : vector<8x1xf32>
    %17 = arith.subf %15, %16 : vector<8x1xf32>
    %18 = vector.broadcast %10 : vector<8x1xf32> to vector<8x32xf32>
    %19 = arith.subf %6, %18 : vector<8x32xf32>
    %cst_10 = arith.constant 9.99999974E-6 : f32
    %20 = vector.broadcast %cst_10 : f32 to vector<8x1xf32>
    %21 = arith.addf %17, %20 : vector<8x1xf32>
    %22 = math.rsqrt %21 : vector<8x1xf32>
    %23 = vector.broadcast %22 : vector<8x1xf32> to vector<8x32xf32>
    %24 = arith.mulf %19, %23 : vector<8x32xf32>
    %c0_11 = arith.constant 0 : index
    %c0_12 = arith.constant 0 : index
    %25 = vector.load %arg5[%c0_11, %c0_12] : memref<1x32xf32, #tpu.memory_space<vmem>>, vector<1x32xf32>
    %26 = vector.broadcast %25 : vector<1x32xf32> to vector<8x32xf32>
    %27 = arith.mulf %24, %26 : vector<8x32xf32>
    %c0_13 = arith.constant 0 : index
    %c0_14 = arith.constant 0 : index
    %28 = vector.load %arg6[%c0_13, %c0_14] : memref<1x32xf32, #tpu.memory_space<vmem>>, vector<1x32xf32>
    %29 = vector.broadcast %28 : vector<1x32xf32> to vector<8x32xf32>
    %30 = arith.addf %27, %29 : vector<8x32xf32>
    %cst_15 = arith.constant 0.000000e+00 : f32
    %31 = vector.broadcast %cst_15 : f32 to vector<8x32xf32>
    %32 = arith.maximumf %30, %31 : vector<8x32xf32>
    %33 = tpu.iota {dimensions = array<i32: 1>} : vector<8x8xi32>
    %c0_16 = arith.constant 0 : index
    %c0_17 = arith.constant 0 : index
    %c0_18 = arith.constant 0 : index
    %34 = vector.load %arg2[%c0_16, %c0_17, %c0_18] : memref<1x8x1xi32, #tpu.memory_space<vmem>>, vector<1x8x1xi32>
    %35 = vector.shape_cast %34 : vector<1x8x1xi32> to vector<8x1xi32>
    %c0_i32 = arith.constant 0 : i32
    %36 = vector.broadcast %c0_i32 : i32 to vector<8x1xi32>
    %37 = arith.cmpi eq, %35, %36 : vector<8x1xi32>
    %cst_19 = arith.constant 0.000000e+00 : f32
    %38 = vector.shape_cast %37 : vector<8x1xi1> to vector<8x1xi1>
    %39 = vector.broadcast %38 : vector<8x1xi1> to vector<8x32xi1>
    %40 = vector.broadcast %cst_19 : f32 to vector<8x32xf32>
    %41 = arith.select %39, %32, %40 : vector<8x32xi1>, vector<8x32xf32>
    %cst_20 = arith.constant dense<0xFF800000> : vector<32xf32>
    %42 = vector.multi_reduction <maximumf>, %41, %cst_20 [0] : vector<8x32xf32> to vector<32xf32>
    %43 = vector.shape_cast %42 : vector<32xf32> to vector<1x32xf32>
    %c1_i32 = arith.constant 1 : i32
    %44 = vector.broadcast %c1_i32 : i32 to vector<8x1xi32>
    %45 = arith.cmpi eq, %35, %44 : vector<8x1xi32>
    %cst_21 = arith.constant 0.000000e+00 : f32
    %46 = vector.shape_cast %45 : vector<8x1xi1> to vector<8x1xi1>
    %47 = vector.broadcast %46 : vector<8x1xi1> to vector<8x32xi1>
    %48 = vector.broadcast %cst_21 : f32 to vector<8x32xf32>
    %49 = arith.select %47, %32, %48 : vector<8x32xi1>, vector<8x32xf32>
    %cst_22 = arith.constant dense<0xFF800000> : vector<32xf32>
    %50 = vector.multi_reduction <maximumf>, %49, %cst_22 [0] : vector<8x32xf32> to vector<32xf32>
    %51 = vector.shape_cast %50 : vector<32xf32> to vector<1x32xf32>
    %c2_i32 = arith.constant 2 : i32
    %52 = vector.broadcast %c2_i32 : i32 to vector<8x1xi32>
    %53 = arith.cmpi eq, %35, %52 : vector<8x1xi32>
    %cst_23 = arith.constant 0.000000e+00 : f32
    %54 = vector.shape_cast %53 : vector<8x1xi1> to vector<8x1xi1>
    %55 = vector.broadcast %54 : vector<8x1xi1> to vector<8x32xi1>
    %56 = vector.broadcast %cst_23 : f32 to vector<8x32xf32>
    %57 = arith.select %55, %32, %56 : vector<8x32xi1>, vector<8x32xf32>
    %cst_24 = arith.constant dense<0xFF800000> : vector<32xf32>
    %58 = vector.multi_reduction <maximumf>, %57, %cst_24 [0] : vector<8x32xf32> to vector<32xf32>
    %59 = vector.shape_cast %58 : vector<32xf32> to vector<1x32xf32>
    %c3_i32 = arith.constant 3 : i32
    %60 = vector.broadcast %c3_i32 : i32 to vector<8x1xi32>
    %61 = arith.cmpi eq, %35, %60 : vector<8x1xi32>
    %cst_25 = arith.constant 0.000000e+00 : f32
    %62 = vector.shape_cast %61 : vector<8x1xi1> to vector<8x1xi1>
    %63 = vector.broadcast %62 : vector<8x1xi1> to vector<8x32xi1>
    %64 = vector.broadcast %cst_25 : f32 to vector<8x32xf32>
    %65 = arith.select %63, %32, %64 : vector<8x32xi1>, vector<8x32xf32>
    %cst_26 = arith.constant dense<0xFF800000> : vector<32xf32>
    %66 = vector.multi_reduction <maximumf>, %65, %cst_26 [0] : vector<8x32xf32> to vector<32xf32>
    %67 = vector.shape_cast %66 : vector<32xf32> to vector<1x32xf32>
    %c4_i32 = arith.constant 4 : i32
    %68 = vector.broadcast %c4_i32 : i32 to vector<8x1xi32>
    %69 = arith.cmpi eq, %35, %68 : vector<8x1xi32>
    %cst_27 = arith.constant 0.000000e+00 : f32
    %70 = vector.shape_cast %69 : vector<8x1xi1> to vector<8x1xi1>
    %71 = vector.broadcast %70 : vector<8x1xi1> to vector<8x32xi1>
    %72 = vector.broadcast %cst_27 : f32 to vector<8x32xf32>
    %73 = arith.select %71, %32, %72 : vector<8x32xi1>, vector<8x32xf32>
    %cst_28 = arith.constant dense<0xFF800000> : vector<32xf32>
    %74 = vector.multi_reduction <maximumf>, %73, %cst_28 [0] : vector<8x32xf32> to vector<32xf32>
    %75 = vector.shape_cast %74 : vector<32xf32> to vector<1x32xf32>
    %c5_i32 = arith.constant 5 : i32
    %76 = vector.broadcast %c5_i32 : i32 to vector<8x1xi32>
    %77 = arith.cmpi eq, %35, %76 : vector<8x1xi32>
    %cst_29 = arith.constant 0.000000e+00 : f32
    %78 = vector.shape_cast %77 : vector<8x1xi1> to vector<8x1xi1>
    %79 = vector.broadcast %78 : vector<8x1xi1> to vector<8x32xi1>
    %80 = vector.broadcast %cst_29 : f32 to vector<8x32xf32>
    %81 = arith.select %79, %32, %80 : vector<8x32xi1>, vector<8x32xf32>
    %cst_30 = arith.constant dense<0xFF800000> : vector<32xf32>
    %82 = vector.multi_reduction <maximumf>, %81, %cst_30 [0] : vector<8x32xf32> to vector<32xf32>
    %83 = vector.shape_cast %82 : vector<32xf32> to vector<1x32xf32>
    %c6_i32 = arith.constant 6 : i32
    %84 = vector.broadcast %c6_i32 : i32 to vector<8x1xi32>
    %85 = arith.cmpi eq, %35, %84 : vector<8x1xi32>
    %cst_31 = arith.constant 0.000000e+00 : f32
    %86 = vector.shape_cast %85 : vector<8x1xi1> to vector<8x1xi1>
    %87 = vector.broadcast %86 : vector<8x1xi1> to vector<8x32xi1>
    %88 = vector.broadcast %cst_31 : f32 to vector<8x32xf32>
    %89 = arith.select %87, %32, %88 : vector<8x32xi1>, vector<8x32xf32>
    %cst_32 = arith.constant dense<0xFF800000> : vector<32xf32>
    %90 = vector.multi_reduction <maximumf>, %89, %cst_32 [0] : vector<8x32xf32> to vector<32xf32>
    %91 = vector.shape_cast %90 : vector<32xf32> to vector<1x32xf32>
    %c7_i32 = arith.constant 7 : i32
    %92 = vector.broadcast %c7_i32 : i32 to vector<8x1xi32>
    %93 = arith.cmpi eq, %35, %92 : vector<8x1xi32>
    %cst_33 = arith.constant 0.000000e+00 : f32
    %94 = vector.shape_cast %93 : vector<8x1xi1> to vector<8x1xi1>
    %95 = vector.broadcast %94 : vector<8x1xi1> to vector<8x32xi1>
    %96 = vector.broadcast %cst_33 : f32 to vector<8x32xf32>
    %97 = arith.select %95, %32, %96 : vector<8x32xi1>, vector<8x32xf32>
    %cst_34 = arith.constant dense<0xFF800000> : vector<32xf32>
    %98 = vector.multi_reduction <maximumf>, %97, %cst_34 [0] : vector<8x32xf32> to vector<32xf32>
    %99 = vector.shape_cast %98 : vector<32xf32> to vector<1x32xf32>
    %100 = tpu.concatenate %43, %51, %59, %67, %75, %83, %91, %99 in 0 : vector<1x32xf32>, vector<1x32xf32>, vector<1x32xf32>, vector<1x32xf32>, vector<1x32xf32>, vector<1x32xf32>, vector<1x32xf32>, vector<1x32xf32> -> vector<8x32xf32>
    %101 = vector.broadcast %35 : vector<8x1xi32> to vector<8x8xi32>
    %102 = arith.cmpi eq, %101, %33 : vector<8x8xi32>
    %103 = arith.extui %102 : vector<8x8xi1> to vector<8x8xi32>
    %104 = arith.sitofp %103 : vector<8x8xi32> to vector<8x8xf32>
    %cst_35 = arith.constant dense<0.000000e+00> : vector<8x32xf32>
    %105 = tpu.matmul %104, %100, %cst_35 {dimension_numbers = #tpu.dot_dimension_numbers<[1], [0], [0], [1], [0, 0, 1, 1], [], []>} : vector<8x8xf32>, vector<8x32xf32>, vector<8x32xf32> -> vector<8x32xf32>
    %106 = tpu.concatenate %32, %105 in 1 : vector<8x32xf32>, vector<8x32xf32> -> vector<8x64xf32>
    %c0_36 = arith.constant 0 : index
    %c0_37 = arith.constant 0 : index
    %c0_38 = arith.constant 0 : index
    %107 = vector.load %arg7[%c0_36, %c0_37, %c0_38] : memref<1x8x64xf32, #tpu.memory_space<vmem>>, vector<1x8x64xf32>
    %108 = vector.shape_cast %107 : vector<1x8x64xf32> to vector<8x64xf32>
    %109 = vector.shape_cast %106 : vector<8x64xf32> to vector<1x8x64xf32>
    tpu.vector_store %arg7[%c0_36, %c0_37, %c0_38], %109 {strides = array<i32>} : memref<1x8x64xf32, #tpu.memory_space<vmem>>, vector<1x8x64xf32>,
    return
  }
  func.func @transform_0(%arg0: i32) -> (i32, i32, i32) {
    %c0_i32 = arith.constant 0 : i32
    %c0_i32_0 = arith.constant 0 : i32
    %c0_i32_1 = arith.constant 0 : i32
    return %arg0, %c0_i32, %c0_i32_0 : i32, i32, i32
  }
  func.func @transform_1(%arg0: i32) -> (i32, i32, i32) {
    %c0_i32 = arith.constant 0 : i32
    %c0_i32_0 = arith.constant 0 : i32
    %c0_i32_1 = arith.constant 0 : i32
    return %arg0, %c0_i32, %c0_i32_0 : i32, i32, i32
  }
  func.func @transform_2(%arg0: i32) -> (i32, i32) {
    %c0_i32 = arith.constant 0 : i32
    %c0_i32_0 = arith.constant 0 : i32
    %c0_i32_1 = arith.constant 0 : i32
    return %c0_i32, %c0_i32_0 : i32, i32
  }
  func.func @transform_3(%arg0: i32) -> (i32, i32) {
    %c0_i32 = arith.constant 0 : i32
    %c0_i32_0 = arith.constant 0 : i32
    %c0_i32_1 = arith.constant 0 : i32
    return %c0_i32, %c0_i32_0 : i32, i32
  }
  func.func @transform_4(%arg0: i32) -> (i32, i32) {
    %c0_i32 = arith.constant 0 : i32
    %c0_i32_0 = arith.constant 0 : i32
    %c0_i32_1 = arith.constant 0 : i32
    return %c0_i32, %c0_i32_0 : i32, i32
  }
  func.func @transform_5(%arg0: i32) -> (i32, i32) {
    %c0_i32 = arith.constant 0 : i32
    %c0_i32_0 = arith.constant 0 : i32
    %c0_i32_1 = arith.constant 0 : i32
    return %c0_i32, %c0_i32_0 : i32, i32
  }
  func.func @transform_6(%arg0: i32) -> (i32, i32, i32) {
    %c0_i32 = arith.constant 0 : i32
    %c0_i32_0 = arith.constant 0 : i32
    %c0_i32_1 = arith.constant 0 : i32
    return %arg0, %c0_i32, %c0_i32_0 : i32, i32, i32
  }
}

</mosaic_0001>

<llo_original>
// kernel: tpu_custom_call.1
$region0: #{tpu_custom_call.1}
  #allocation0 [shape = 'u32[]', space=smem, size = 0x4, offset = 0x4, fixed_abs, tag = 'smem constant byte address 0x4 - core index']
  #allocation1 [shape = 'u32[144,128]{1,0:T(1,128)}', space=vmem, size = 0x12000, scoped, tag = 'internal scratch']
  %s0 = inlined_call_operand.vmem [shape: f32[2,8,4], index: 0, kind: input, shape index: {}]
  %s1 = inlined_call_operand.vmem [shape: s32[2,8,1], index: 1, kind: input, shape index: {}]
  %s2 = inlined_call_operand.vmem [shape: f32[4,32], index: 2, kind: input, shape index: {}]
  %s3 = inlined_call_operand.vmem [shape: f32[1,32], index: 3, kind: input, shape index: {}]
  %s4 = inlined_call_operand.vmem [shape: f32[1,32], index: 4, kind: input, shape index: {}]
  %s5 = inlined_call_operand.vmem [shape: f32[1,32], index: 5, kind: input, shape index: {}]
  %s6 = inlined_call_operand.hbm [shape: f32[2,8,64], index: 6, kind: output, shape index: {}]
  %s7 = sld [smem:[#allocation0]]
  $region57: #{tpu_custom_call.1} parent=0
    _
  %s9 = ssub.s32 1, %s7
  %s10 = scalar_select 0, %s9, %s7
  $region1: #{tpu_custom_call.1} parent=0
    #allocation2 [shape = 'u8[8192]{0}', space=vmem, size = 0x2000, scoped, tag = 'output window, operand 0']
    #allocation3 [shape = 's32[2]{0}', space=sflag, size = 0x8, scoped, tag = 'scoped memory for tpu_custom_call.1']
    %11 = vsyncpa [#allocation3], 0
    %s12 = scalar_lea.sflag [#allocation3], 1
    %13 = vsyncpa %s12, 0
    loop: start=0, step=1, limit=4
    $region2: #{tpu_custom_call.1} parent=1 // loop_pre_header
      _
    $region3: #{tpu_custom_call.1} parent=1 // loop_header
      %s15 = sphi 0, %s19
      %p16 = scmp.ge.s32.totalorder %s15, 4
      %s25 = sphi 0, %s27
      %s28 = sphi 0, %s25
      %s29 = sphi 0, %s28
      %s45 = sphi 0, %s29
      %s51 = sphi 0, %s53
      %s54 = sphi 0, %s51
      %s55 = sphi 0, %s54
      %s71 = sphi 0, %s55
      %s75 = sphi 0, %s75
      %s77 = sphi 0, %s75
      %s78 = sphi 0, %s77
      %s92 = sphi 0, %s78
      %s96 = sphi 0, %s96
      %s98 = sphi 0, %s96
      %s99 = sphi 0, %s98
      %s113 = sphi 0, %s99
      %s117 = sphi 0, %s117
      %s119 = sphi 0, %s117
      %s120 = sphi 0, %s119
      %s134 = sphi 0, %s120
      %s138 = sphi 0, %s138
      %s140 = sphi 0, %s138
      %s141 = sphi 0, %s140
      %s155 = sphi 0, %s141
      %s161 = sphi 0, %s163
      %s164 = sphi 0, %s161
      %s165 = sphi 0, %s164
      %s181 = sphi 0, %s165
    $region4: #{tpu_custom_call.1} parent=1 // loop_header_branch
      %18 = sbr.rel (%p16) target = $region8
    $region5: #{tpu_custom_call.1} parent=1 // loop_body
      %s20 = ssub.s32 %s15, 1
      %s21 = ssub.s32 %s15, 2
      %s22 = sadd.s32 %s15, 1
      %s23 = ssub.s32 %s15, %s22
      %p24 = scmp.eq.s32.totalorder %s23, 0
      %s26 = sadd.s32 %s25, 1
      %s27 = scalar_select %p24, %s25, %s26
      %p30 = pneg %p24
      %p31 = scmp.eq.s32.totalorder %s15, 1
      %p32 = por %p30, %p31
      %p33 = scmp.ne.s32.totalorder %s25, %s28
      %p34 = scmp.eq.s32.totalorder %s15, 0
      %p35 = por %p33, %p34
      %p36 = scmp.ne.s32.totalorder %s25, %s28
      %p37 = scmp.eq.s32.totalorder %s20, 1
      %p38 = por %p36, %p37
      %p39 = scmp.ne.s32.totalorder %s28, %s29
      %p40 = scmp.eq.s32.totalorder %s20, 0
      %p41 = por %p39, %p40
      %p42 = scmp.ne.s32.totalorder %s28, %s29
      %p43 = scmp.eq.s32.totalorder %s21, 1
      %p44 = por %p42, %p43
      %p46 = scmp.ne.s32.totalorder %s29, %s45
      %p47 = scmp.eq.s32.totalorder %s21, 0
      %p48 = por %p46, %p47
      %s49 = ssub.s32 %s15, %s22
      %p50 = scmp.eq.s32.totalorder %s49, 0
      %s52 = sadd.s32 %s51, 1
      %s53 = scalar_select %p50, %s51, %s52
      %p56 = pneg %p50
      %p57 = scmp.eq.s32.totalorder %s15, 1
      %p58 = por %p56, %p57
      %p59 = scmp.ne.s32.totalorder %s51, %s54
      %p60 = scmp.eq.s32.totalorder %s15, 0
      %p61 = por %p59, %p60
      %p62 = scmp.ne.s32.totalorder %s51, %s54
      %p63 = scmp.eq.s32.totalorder %s20, 1
      %p64 = por %p62, %p63
      %p65 = scmp.ne.s32.totalorder %s54, %s55
      %p66 = scmp.eq.s32.totalorder %s20, 0
      %p67 = por %p65, %p66
      %p68 = scmp.ne.s32.totalorder %s54, %s55
      %p69 = scmp.eq.s32.totalorder %s21, 1
      %p70 = por %p68, %p69
      %p72 = scmp.ne.s32.totalorder %s55, %s71
      %p73 = scmp.eq.s32.totalorder %s21, 0
      %p74 = por %p72, %p73
      %s76 = sadd.s32 %s75, 1
      %p79 = scmp.eq.s32.totalorder %s15, 1
      %p80 = scmp.ne.s32.totalorder %s75, %s77
      %p81 = scmp.eq.s32.totalorder %s15, 0
      %p82 = por %p80, %p81
      %p83 = scmp.ne.s32.totalorder %s75, %s77
      %p84 = scmp.eq.s32.totalorder %s20, 1
      %p85 = por %p83, %p84
      %p86 = scmp.ne.s32.totalorder %s77, %s78
      %p87 = scmp.eq.s32.totalorder %s20, 0
      %p88 = por %p86, %p87
      %p89 = scmp.ne.s32.totalorder %s77, %s78
      %p90 = scmp.eq.s32.totalorder %s21, 1
      %p91 = por %p89, %p90
      %p93 = scmp.ne.s32.totalorder %s78, %s92
      %p94 = scmp.eq.s32.totalorder %s21, 0
      %p95 = por %p93, %p94
      %s97 = sadd.s32 %s96, 1
      %p100 = scmp.eq.s32.totalorder %s15, 1
      %p101 = scmp.ne.s32.totalorder %s96, %s98
      %p102 = scmp.eq.s32.totalorder %s15, 0
      %p103 = por %p101, %p102
      %p104 = scmp.ne.s32.totalorder %s96, %s98
      %p105 = scmp.eq.s32.totalorder %s20, 1
      %p106 = por %p104, %p105
      %p107 = scmp.ne.s32.totalorder %s98, %s99
      %p108 = scmp.eq.s32.totalorder %s20, 0
      %p109 = por %p107, %p108
      %p110 = scmp.ne.s32.totalorder %s98, %s99
      %p111 = scmp.eq.s32.totalorder %s21, 1
      %p112 = por %p110, %p111
      %p114 = scmp.ne.s32.totalorder %s99, %s113
      %p115 = scmp.eq.s32.totalorder %s21, 0
      %p116 = por %p114, %p115
      %s118 = sadd.s32 %s117, 1
      %p121 = scmp.eq.s32.totalorder %s15, 1
      %p122 = scmp.ne.s32.totalorder %s117, %s119
      %p123 = scmp.eq.s32.totalorder %s15, 0
      %p124 = por %p122, %p123
      %p125 = scmp.ne.s32.totalorder %s117, %s119
      %p126 = scmp.eq.s32.totalorder %s20, 1
      %p127 = por %p125, %p126
      %p128 = scmp.ne.s32.totalorder %s119, %s120
      %p129 = scmp.eq.s32.totalorder %s20, 0
      %p130 = por %p128, %p129
      %p131 = scmp.ne.s32.totalorder %s119, %s120
      %p132 = scmp.eq.s32.totalorder %s21, 1
      %p133 = por %p131, %p132
      %p135 = scmp.ne.s32.totalorder %s120, %s134
      %p136 = scmp.eq.s32.totalorder %s21, 0
      %p137 = por %p135, %p136
      %s139 = sadd.s32 %s138, 1
      %p142 = scmp.eq.s32.totalorder %s15, 1
      %p143 = scmp.ne.s32.totalorder %s138, %s140
      %p144 = scmp.eq.s32.totalorder %s15, 0
      %p145 = por %p143, %p144
      %p146 = scmp.ne.s32.totalorder %s138, %s140
      %p147 = scmp.eq.s32.totalorder %s20, 1
      %p148 = por %p146, %p147
      %p149 = scmp.ne.s32.totalorder %s140, %s141
      %p150 = scmp.eq.s32.totalorder %s20, 0
      %p151 = por %p149, %p150
      %p152 = scmp.ne.s32.totalorder %s140, %s141
      %p153 = scmp.eq.s32.totalorder %s21, 1
      %p154 = por %p152, %p153
      %p156 = scmp.ne.s32.totalorder %s141, %s155
      %p157 = scmp.eq.s32.totalorder %s21, 0
      %p158 = por %p156, %p157
      %s159 = ssub.s32 %s15, %s22
      %p160 = scmp.eq.s32.totalorder %s159, 0
      %s162 = sadd.s32 %s161, 1
      %s163 = scalar_select %p160, %s161, %s162
      %p166 = pneg %p160
      %p167 = scmp.eq.s32.totalorder %s15, 1
      %p168 = por %p166, %p167
      %p169 = scmp.ne.s32.totalorder %s161, %s164
      %p170 = scmp.eq.s32.totalorder %s15, 0
      %p171 = por %p169, %p170
      %p172 = scmp.ne.s32.totalorder %s161, %s164
      %p173 = scmp.eq.s32.totalorder %s20, 1
      %p174 = por %p172, %p173
      %p175 = scmp.ne.s32.totalorder %s164, %s165
      %p176 = scmp.eq.s32.totalorder %s20, 0
      %p177 = por %p175, %p176
      %p178 = scmp.ne.s32.totalorder %s164, %s165
      %p179 = scmp.eq.s32.totalorder %s21, 1
      %p180 = por %p178, %p179
      %p182 = scmp.ne.s32.totalorder %s165, %s181
      %p183 = scmp.eq.s32.totalorder %s21, 0
      %p184 = por %p182, %p183
      %p185 = scmp.le.s32.totalorder 1, %s15
      %p186 = scmp.lt.s32.totalorder %s15, 3
      %p187 = pnand %p185, %p186
      %p188 = pneg %p187
      // Predicated region
      $region9: #{tpu_custom_call.1} parent=5 // pred_check
        _
      $region10: #{tpu_custom_call.1} parent=5 // pred_check_branch
        %190 = sbr.rel (%p187) target = $region12
      $region11: #{tpu_custom_call.1} parent=5 // pred_region
        %s191 = ssub.s32 %s15, 1
        // Predicated region
        $region13: #{tpu_custom_call.1} parent=11 // pred_check
          %p192 = pneg %p88
        $region14: #{tpu_custom_call.1} parent=11 // pred_check_branch
          %194 = sbr.rel (%p192) target = $region16
        $region15: #{tpu_custom_call.1} parent=11 // pred_region
          _
        $region16: #{tpu_custom_call.1} parent=11 // pred_fallthru
          _
        // Predicated region
        $region17: #{tpu_custom_call.1} parent=11 // pred_check
          %p195 = pneg %p109
        $region18: #{tpu_custom_call.1} parent=11 // pred_check_branch
          %197 = sbr.rel (%p195) target = $region20
        $region19: #{tpu_custom_call.1} parent=11 // pred_region
          _
        $region20: #{tpu_custom_call.1} parent=11 // pred_fallthru
          _
        // Predicated region
        $region21: #{tpu_custom_call.1} parent=11 // pred_check
          %p198 = pneg %p130
        $region22: #{tpu_custom_call.1} parent=11 // pred_check_branch
          %200 = sbr.rel (%p198) target = $region24
        $region23: #{tpu_custom_call.1} parent=11 // pred_region
          _
        $region24: #{tpu_custom_call.1} parent=11 // pred_fallthru
          _
        // Predicated region
        $region25: #{tpu_custom_call.1} parent=11 // pred_check
          %p201 = pneg %p151
        $region26: #{tpu_custom_call.1} parent=11 // pred_check_branch
          %203 = sbr.rel (%p201) target = $region28
        $region27: #{tpu_custom_call.1} parent=11 // pred_region
          _
        $region28: #{tpu_custom_call.1} parent=11 // pred_fallthru
          _
      $region12: #{tpu_custom_call.1} parent=5 // pred_fallthru
        _
      %p204 = scmp.lt.s32.totalorder %s15, 2
      // Predicated region
      $region29: #{tpu_custom_call.1} parent=5 // pred_check
        %p205 = pneg %p204
      $region30: #{tpu_custom_call.1} parent=5 // pred_check_branch
        %207 = sbr.rel (%p205) target = $region32
      $region31: #{tpu_custom_call.1} parent=5 // pred_region
        // Predicated region
        $region33: #{tpu_custom_call.1} parent=31 // pred_check
          %p208 = pneg %p35
        $region34: #{tpu_custom_call.1} parent=31 // pred_check_branch
          %210 = sbr.rel (%p208) target = $region36
        $region35: #{tpu_custom_call.1} parent=31 // pred_region
          %p211 = scmp.lt.s32.totalorder %s15, 1
          %s212 = scalar_select %p211, %s15, 1
          %s213 = smul.addr %s212, 8
          %s214 = scalar_lea.vmem %s0, %s213
        $region36: #{tpu_custom_call.1} parent=31 // pred_fallthru
          _
        // Predicated region
        $region37: #{tpu_custom_call.1} parent=31 // pred_check
          %p215 = pneg %p61
        $region38: #{tpu_custom_call.1} parent=31 // pred_check_branch
          %217 = sbr.rel (%p215) target = $region40
        $region39: #{tpu_custom_call.1} parent=31 // pred_region
          %p218 = scmp.lt.s32.totalorder %s15, 1
          %s219 = scalar_select %p218, %s15, 1
          %s220 = smul.addr %s219, 8
          %s221 = scalar_lea.vmem %s1, %s220
        $region40: #{tpu_custom_call.1} parent=31 // pred_fallthru
          _
      $region32: #{tpu_custom_call.1} parent=5 // pred_fallthru
        _
      %p222 = scmp.le.s32.totalorder 1, %s15
      %p223 = scmp.lt.s32.totalorder %s15, 3
      %p224 = pnand %p222, %p223
      %p225 = pneg %p224
      // Predicated region
      $region41: #{tpu_custom_call.1} parent=5 // pred_check
        _
      $region42: #{tpu_custom_call.1} parent=5 // pred_check_branch
        %227 = sbr.rel (%p224) target = $region44
      $region43: #{tpu_custom_call.1} parent=5 // pred_region
        %s228 = ssub.s32 %s15, 1
        %p229 = scmp.lt.s32.totalorder %s20, 1
        %s230 = scalar_select %p229, %s20, 1
        %s231 = smul.addr %s230, 8
        %s232 = scalar_lea.vmem %s0, %s231
        %p233 = pneg %p41
        %p234 = pneg %p38
        %p235 = scmp.lt.s32.totalorder %s20, 1
        %s236 = scalar_select %p235, %s20, 1
        %s237 = smul.addr %s236, 8
        %s238 = scalar_lea.vmem %s1, %s237
        %p239 = pneg %p67
        %p240 = pneg %p64
        %p241 = pneg %p88
        %p242 = pneg %p85
        %p243 = pneg %p109
        %p244 = pneg %p106
        %p245 = pneg %p130
        %p246 = pneg %p127
        %p247 = pneg %p151
        %p248 = pneg %p148
        %p249 = pneg %p177
        %p250 = pneg %p174
        %s251 = sand.u32 %s164, 1
        %s252 = scalar_lea.sflag [#allocation3], %s251
        %s253 = sand.u32 %s164, 1
        %s254 = smul.addr %s253, 8
        %s255 = scalar_lea.vmem [#allocation2], %s254
        %p256 = scmp.lt.s32.totalorder %s20, 1
        %s257 = scalar_select %p256, %s20, 1
        %s258 = smul.addr %s257, 8
        %s259 = scalar_lea.vmem %s0, %s258
        %p260 = scmp.lt.s32.totalorder %s20, 1
        %s261 = scalar_select %p260, %s20, 1
        %s262 = smul.addr %s261, 8
        %s263 = scalar_lea.vmem %s1, %s262
        %v264 = vld [vmem:[%s259] sm:$0xff]
        %v265 = vld [vmem:[%s2] sm:$0xf]
        %v266 = vld [vmem:[%s3] sm:$0x1]
        %v268 = vlaneseq
        %v269 = vshrl.u32 %v268, 7
        %v270 = vsub.s32 0, %v269
        %v271 = vrot.slane %v266, %v270
        %vm273 = vcmask 31744
        %v275 = vsel %vm273, %v264, 0
        %vm277 = vcmask 1043456
        %v279 = vsel %vm277, %v265, 0
        %281 = vmatprep.subr.mxu0 0.0
        %282 = vmatpush1.msra.mxu0 %v279
        %283 = vmatprep.subr.mxu0 0.0
        %284 = vmatpush1.msra.mxu0 0.0
        %285 = vmatprep.subr.mxu0 0.0
        %286 = vmatpush1.msra.mxu0 0.0
        %287 = vmatprep.subr.mxu0 0.0
        %288 = vmatpush1.msra.mxu0 0.0
        %289 = vmatprep.subr.mxu0 0.0
        %290 = vmatpush1.msra.mxu0 0.0
        %291 = vmatprep.subr.mxu0 0.0
        %292 = vmatpush1.msra.mxu0 0.0
        %293 = vmatprep.subr.mxu0 0.0
        %294 = vmatpush1.msra.mxu0 0.0
        %295 = vmatprep.subr.mxu0 0.0
        %296 = vmatpush1.msra.mxu0 0.0
        %297 = vmatprep.subr.mxu0 0.0
        %298 = vmatpush1.msra.mxu0 0.0
        %299 = vmatprep.subr.mxu0 0.0
        %300 = vmatpush1.msra.mxu0 0.0
        %301 = vmatprep.subr.mxu0 0.0
        %302 = vmatpush1.msra.mxu0 0.0
        %303 = vmatprep.subr.mxu0 0.0
        %304 = vmatpush1.msra.mxu0 0.0
        %305 = vmatprep.subr.mxu0 0.0
        %306 = vmatpush1.msra.mxu0 0.0
        %307 = vmatprep.subr.mxu0 0.0
        %308 = vmatpush1.msra.mxu0 0.0
        %309 = vmatprep.subr.mxu0 0.0
        %310 = vmatpush1.msra.mxu0 0.0
        %311 = vmatprep.subr.mxu0 0.0
        %312 = vmatpush1.msra.mxu0 0.0
        %313 = vmatprep.subr.mxu0 0.0
        %314 = vmatpush1.msra.mxu0 0.0
        %315 = vmatprep.subr.mxu0 0.0
        %316 = vmatpush1.msra.mxu0 0.0
        %317 = vmatprep.subr.mxu0 0.0
        %318 = vmatpush1.msra.mxu0 0.0
        %319 = vmatprep.subr.mxu0 0.0
        %320 = vmatpush1.msra.mxu0 0.0
        %321 = vmatprep.subr.mxu0 0.0
        %322 = vmatpush1.msra.mxu0 0.0
        %323 = vmatprep.subr.mxu0 0.0
        %324 = vmatpush1.msra.mxu0 0.0
        %325 = vmatprep.subr.mxu0 0.0
        %326 = vmatpush1.msra.mxu0 0.0
        %327 = vmatprep.subr.mxu0 0.0
        %328 = vmatpush1.msra.mxu0 0.0
        %329 = vmatprep.subr.mxu0 0.0
        %330 = vmatpush1.msra.mxu0 0.0
        %331 = vmatprep.subr.mxu0 0.0
        %332 = vmatpush1.msra.mxu0 0.0
        %333 = vmatprep.subr.mxu0 0.0
        %334 = vmatpush1.msra.mxu0 0.0
        %335 = vmatprep.subr.mxu0 0.0
        %336 = vmatpush1.msra.mxu0 0.0
        %337 = vmatprep.subr.mxu0 0.0
        %338 = vmatpush1.msra.mxu0 0.0
        %339 = vmatprep.subr.mxu0 0.0
        %340 = vmatpush1.msra.mxu0 0.0
        %341 = vmatprep.subr.mxu0 0.0
        %342 = vmatpush1.msra.mxu0 0.0
        %343 = vmatprep.subr.mxu0 0.0
        %344 = vmatpush1.msra.mxu0 0.0
        %345 = vmatprep.mubr.f32.mxu0 0.0
        %346 = vmatmul.mubr.f32.gmra.mrb[0].mxu0 %v275
        %v347 = vpop.f32.mrb[0].mxu0
        %v348 = vadd.f32 %v271, %v347
        %v349 = vpop.f32.mrb[0].mxu0
        %350 = vdwg.mxu0
        %vm351 = vcmask 261120
        %v352 = vsel %vm351, %v348, 0.0
        %353 = vadd.xlane.f32.xlu0 %v352
        %v354 = vpop.xlane.xlu0 %353
        %v355 = vrcp.pop 32.0
        %v356 = vmul.f32 %v354, %v355
        %v357 = vmul.f32 %v348, %v348
        %v358 = vsel %vm351, %v357, 0.0
        %359 = vadd.xlane.f32.xlu0 %v358
        %v360 = vpop.xlane.xlu0 %359
        %v361 = vmul.f32 %v360, %v355
        %v362 = vmul.f32 %v356, %v356
        %v363 = vsub.f32 %v361, %v362
        %v364 = vsub.f32 %v348, %v356
        %v365 = vadd.f32 %v363, 1e-05
        %v366 = vrsqrt.pop %v365
        %v367 = vmul.f32 %v364, %v366
        %v368 = vld [vmem:[%s4] sm:$0x1]
        %v370 = vlaneseq
        %v371 = vshrl.u32 %v370, 7
        %v372 = vsub.s32 0, %v371
        %v373 = vrot.slane %v368, %v372
        %v375 = vmul.f32 %v367, %v373
        %v376 = vld [vmem:[%s5] sm:$0x1]
        %v378 = vlaneseq
        %v379 = vshrl.u32 %v378, 7
        %v380 = vsub.s32 0, %v379
        %v381 = vrot.slane %v376, %v380
        %v383 = vadd.f32 %v375, %v381
        %v384 = vmax.f32 %v383, 0.0
        %v385 = vlaneseq
        %v386 = vand.u32 %v385, 127
        %v387 = vld [vmem:[%s263] sm:$0xff]
        %vm388 = vcmp.eq.s32.totalorder %v387, 0
        %v389 = vsel %vm388, 1, 0
        %390 = vset.pattern.permute.xlu0 0
        %391 = vperm.xlu0 %390, %v389
        %v392 = vpop.permute.xlu0 %391
        %vm393 = vcmp.eq.s32.totalorder %v392, 1
        %v394 = vsel %vm393, %v384, 0.0
        %v395 = vsel %vm351, %v394, -inf
        %v396 = vrot.slane %v395, 4
        %v397 = vmax.f32 %v395, %v396
        %v398 = vrot.slane %v397, 2
        %v399 = vmax.f32 %v397, %v398
        %v400 = vrot.slane %v399, 1
        %v401 = vmax.f32 %v399, %v400
        %vm402 = vcmp.eq.s32.totalorder %v387, 1
        %v403 = vsel %vm402, 1, 0
        %404 = vset.pattern.permute.xlu0 0
        %405 = vperm.xlu0 %404, %v403
        %v406 = vpop.permute.xlu0 %405
        %vm407 = vcmp.eq.s32.totalorder %v406, 1
        %v408 = vsel %vm407, %v384, 0.0
        %v409 = vsel %vm351, %v408, -inf
        %v410 = vrot.slane %v409, 4
        %v411 = vmax.f32 %v409, %v410
        %v412 = vrot.slane %v411, 2
        %v413 = vmax.f32 %v411, %v412
        %v414 = vrot.slane %v413, 1
        %v415 = vmax.f32 %v413, %v414
        %vm416 = vcmp.eq.s32.totalorder %v387, 2
        %v417 = vsel %vm416, 1, 0
        %418 = vset.pattern.permute.xlu0 0
        %419 = vperm.xlu0 %418, %v417
        %v420 = vpop.permute.xlu0 %419
        %vm421 = vcmp.eq.s32.totalorder %v420, 1
        %v422 = vsel %vm421, %v384, 0.0
        %v423 = vsel %vm351, %v422, -inf
        %v424 = vrot.slane %v423, 4
        %v425 = vmax.f32 %v423, %v424
        %v426 = vrot.slane %v425, 2
        %v427 = vmax.f32 %v425, %v426
        %v428 = vrot.slane %v427, 1
        %v429 = vmax.f32 %v427, %v428
        %vm430 = vcmp.eq.s32.totalorder %v387, 3
        %v431 = vsel %vm430, 1, 0
        %432 = vset.pattern.permute.xlu0 0
        %433 = vperm.xlu0 %432, %v431
        %v434 = vpop.permute.xlu0 %433
        %vm435 = vcmp.eq.s32.totalorder %v434, 1
        %v436 = vsel %vm435, %v384, 0.0
        %v437 = vsel %vm351, %v436, -inf
        %v438 = vrot.slane %v437, 4
        %v439 = vmax.f32 %v437, %v438
        %v440 = vrot.slane %v439, 2
        %v441 = vmax.f32 %v439, %v440
        %v442 = vrot.slane %v441, 1
        %v443 = vmax.f32 %v441, %v442
        %vm444 = vcmp.eq.s32.totalorder %v387, 4
        %v445 = vsel %vm444, 1, 0
        %446 = vset.pattern.permute.xlu0 0
        %447 = vperm.xlu0 %446, %v445
        %v448 = vpop.permute.xlu0 %447
        %vm449 = vcmp.eq.s32.totalorder %v448, 1
        %v450 = vsel %vm449, %v384, 0.0
        %v451 = vsel %vm351, %v450, -inf
        %v452 = vrot.slane %v451, 4
        %v453 = vmax.f32 %v451, %v452
        %v454 = vrot.slane %v453, 2
        %v455 = vmax.f32 %v453, %v454
        %v456 = vrot.slane %v455, 1
        %v457 = vmax.f32 %v455, %v456
        %vm458 = vcmp.eq.s32.totalorder %v387, 5
        %v459 = vsel %vm458, 1, 0
        %460 = vset.pattern.permute.xlu0 0
        %461 = vperm.xlu0 %460, %v459
        %v462 = vpop.permute.xlu0 %461
        %vm463 = vcmp.eq.s32.totalorder %v462, 1
        %v464 = vsel %vm463, %v384, 0.0
        %v465 = vsel %vm351, %v464, -inf
        %v466 = vrot.slane %v465, 4
        %v467 = vmax.f32 %v465, %v466
        %v468 = vrot.slane %v467, 2
        %v469 = vmax.f32 %v467, %v468
        %v470 = vrot.slane %v469, 1
        %v471 = vmax.f32 %v469, %v470
        %vm472 = vcmp.eq.s32.totalorder %v387, 6
        %v473 = vsel %vm472, 1, 0
        %474 = vset.pattern.permute.xlu0 0
        %475 = vperm.xlu0 %474, %v473
        %v476 = vpop.permute.xlu0 %475
        %vm477 = vcmp.eq.s32.totalorder %v476, 1
        %v478 = vsel %vm477, %v384, 0.0
        %v479 = vsel %vm351, %v478, -inf
        %v480 = vrot.slane %v479, 4
        %v481 = vmax.f32 %v479, %v480
        %v482 = vrot.slane %v481, 2
        %v483 = vmax.f32 %v481, %v482
        %v484 = vrot.slane %v483, 1
        %v485 = vmax.f32 %v483, %v484
        %vm486 = vcmp.eq.s32.totalorder %v387, 7
        %v487 = vsel %vm486, 1, 0
        %488 = vset.pattern.permute.xlu0 0
        %489 = vperm.xlu0 %488, %v487
        %v490 = vpop.permute.xlu0 %489
        %vm491 = vcmp.eq.s32.totalorder %v490, 1
        %v492 = vsel %vm491, %v384, 0.0
        %v493 = vsel %vm351, %v492, -inf
        %v494 = vrot.slane %v493, 4
        %v495 = vmax.f32 %v493, %v494
        %v496 = vrot.slane %v495, 2
        %v497 = vmax.f32 %v495, %v496
        %v498 = vrot.slane %v497, 1
        %v499 = vmax.f32 %v497, %v498
        %vm500 = vcmask 1040384
        %v501 = vsel %vm500, %v401, %v415
        %vm502 = vcmask 1041408
        %v503 = vsel %vm502, %v501, %v429
        %vm504 = vcmask 1042432
        %v505 = vsel %vm504, %v503, %v443
        %v506 = vsel %vm277, %v505, %v457
        %vm507 = vcmask 1044480
        %v508 = vsel %vm507, %v506, %v471
        %vm509 = vcmask 1045504
        %v510 = vsel %vm509, %v508, %v485
        %vm511 = vcmask 1046528
        %v512 = vsel %vm511, %v510, %v499
        %513 = vset.pattern.permute.xlu0 0
        %514 = vperm.xlu0 %513, %v387
        %v515 = vpop.permute.xlu0 %514
        %vm516 = vcmp.eq.s32.totalorder %v515, %v386
        %v517 = vsel %vm516, 1, 0
        %v518 = vcvt.s32.f32 %v517
        %vm519 = vcmask 64512
        %v521 = vsel %vm519, %v518, 0
        %523 = vmatprep.subr.mxu0 0.0
        %524 = vmatpush1.msra.mxu0 %v512
        %525 = vmatprep.subr.mxu0 0.0
        %526 = vmatpush1.msra.mxu0 0.0
        %527 = vmatprep.subr.mxu0 0.0
        %528 = vmatpush1.msra.mxu0 0.0
        %529 = vmatprep.subr.mxu0 0.0
        %530 = vmatpush1.msra.mxu0 0.0
        %531 = vmatprep.subr.mxu0 0.0
        %532 = vmatpush1.msra.mxu0 0.0
        %533 = vmatprep.subr.mxu0 0.0
        %534 = vmatpush1.msra.mxu0 0.0
        %535 = vmatprep.subr.mxu0 0.0
        %536 = vmatpush1.msra.mxu0 0.0
        %537 = vmatprep.subr.mxu0 0.0
        %538 = vmatpush1.msra.mxu0 0.0
        %539 = vmatprep.subr.mxu0 0.0
        %540 = vmatpush1.msra.mxu0 0.0
        %541 = vmatprep.subr.mxu0 0.0
        %542 = vmatpush1.msra.mxu0 0.0
        %543 = vmatprep.subr.mxu0 0.0
        %544 = vmatpush1.msra.mxu0 0.0
        %545 = vmatprep.subr.mxu0 0.0
        %546 = vmatpush1.msra.mxu0 0.0
        %547 = vmatprep.subr.mxu0 0.0
        %548 = vmatpush1.msra.mxu0 0.0
        %549 = vmatprep.subr.mxu0 0.0
        %550 = vmatpush1.msra.mxu0 0.0
        %551 = vmatprep.subr.mxu0 0.0
        %552 = vmatpush1.msra.mxu0 0.0
        %553 = vmatprep.subr.mxu0 0.0
        %554 = vmatpush1.msra.mxu0 0.0
        %555 = vmatprep.subr.mxu0 0.0
        %556 = vmatpush1.msra.mxu0 0.0
        %557 = vmatprep.subr.mxu0 0.0
        %558 = vmatpush1.msra.mxu0 0.0
        %559 = vmatprep.subr.mxu0 0.0
        %560 = vmatpush1.msra.mxu0 0.0
        %561 = vmatprep.subr.mxu0 0.0
        %562 = vmatpush1.msra.mxu0 0.0
        %563 = vmatprep.subr.mxu0 0.0
        %564 = vmatpush1.msra.mxu0 0.0
        %565 = vmatprep.subr.mxu0 0.0
        %566 = vmatpush1.msra.mxu0 0.0
        %567 = vmatprep.subr.mxu0 0.0
        %568 = vmatpush1.msra.mxu0 0.0
        %569 = vmatprep.subr.mxu0 0.0
        %570 = vmatpush1.msra.mxu0 0.0
        %571 = vmatprep.subr.mxu0 0.0
        %572 = vmatpush1.msra.mxu0 0.0
        %573 = vmatprep.subr.mxu0 0.0
        %574 = vmatpush1.msra.mxu0 0.0
        %575 = vmatprep.subr.mxu0 0.0
        %576 = vmatpush1.msra.mxu0 0.0
        %577 = vmatprep.subr.mxu0 0.0
        %578 = vmatpush1.msra.mxu0 0.0
        %579 = vmatprep.subr.mxu0 0.0
        %580 = vmatpush1.msra.mxu0 0.0
        %581 = vmatprep.subr.mxu0 0.0
        %582 = vmatpush1.msra.mxu0 0.0
        %583 = vmatprep.subr.mxu0 0.0
        %584 = vmatpush1.msra.mxu0 0.0
        %585 = vmatprep.subr.mxu0 0.0
        %586 = vmatpush1.msra.mxu0 0.0
        %587 = vmatprep.mubr.f32.mxu0 0.0
        %588 = vmatmul.mubr.f32.gmra.mrb[0].mxu0 %v521
        %v589 = vpop.f32.mrb[0].mxu0
        %v590 = vadd.f32 0.0, %v589
        %v591 = vpop.f32.mrb[0].mxu0
        %592 = vdwg.mxu0
        %594 = vrot.lane.b32.xlu0 %v590, 32
        %v595 = vpop.permute.xlu0 %594
        %v597 = vsel %vm351, %v384, %v595
        %vm598 = vcmask 523264
        %599 = vst.msk [vmem:[%s255] sm:$0xff] %vm598, %v597
        %s600 = sand.u32 %s164, 1
        %s601 = scalar_lea.sflag [#allocation3], %s600
        %s602 = sand.u32 %s164, 1
        %s603 = smul.addr %s602, 8
        %s604 = scalar_lea.vmem [#allocation2], %s603
        // Predicated region
        $region45: #{tpu_custom_call.1} parent=43 // pred_check
          %p605 = pneg %p174
        $region46: #{tpu_custom_call.1} parent=43 // pred_check_branch
          %607 = sbr.rel (%p605) target = $region48
        $region47: #{tpu_custom_call.1} parent=43 // pred_region
          %s609 = ssub.s32 128, 128
          %610 = vsyncadd %s601, %s609
          %s611 = smul.addr %s20, 128
          %s612 = scalar_lea.hbm %s6, %s611
          %s614 = sshll.u32 %s604, 4
          %s615 = int_to_ptr.vmem [resolvable:$true] %s614
          %617 = dma.vmem_to_hbm [thread:$0]  %s615, 128, %s612, %s601
        $region48: #{tpu_custom_call.1} parent=43 // pred_fallthru
          _
      $region44: #{tpu_custom_call.1} parent=5 // pred_fallthru
        _
      %p618 = scmp.le.s32.totalorder 2, %s15
      // Predicated region
      $region49: #{tpu_custom_call.1} parent=5 // pred_check
        %p619 = pneg %p618
      $region50: #{tpu_custom_call.1} parent=5 // pred_check_branch
        %621 = sbr.rel (%p619) target = $region52
      $region51: #{tpu_custom_call.1} parent=5 // pred_region
        %s622 = ssub.s32 %s15, 2
        // Predicated region
        $region53: #{tpu_custom_call.1} parent=51 // pred_check
          %p623 = pneg %p180
        $region54: #{tpu_custom_call.1} parent=51 // pred_check_branch
          %625 = sbr.rel (%p623) target = $region56
        $region55: #{tpu_custom_call.1} parent=51 // pred_region
          %s626 = sand.u32 %s165, 1
          %s627 = scalar_lea.sflag [#allocation3], %s626
          %s628 = sand.u32 %s165, 1
          %s629 = smul.addr %s628, 8
          %s630 = scalar_lea.vmem [#allocation2], %s629
          %631 = dma.done %s627, 128
        $region56: #{tpu_custom_call.1} parent=51 // pred_fallthru
          _
      $region52: #{tpu_custom_call.1} parent=5 // pred_fallthru
        _
    $region6: #{tpu_custom_call.1} parent=1 // loop_footer
      %s19 = sadd.s32 1, %s15
    $region7: #{tpu_custom_call.1} parent=1 // loop_footer_branch
      %14 = sbr.rel target = $region3
    $region8: #{tpu_custom_call.1} parent=1 // loop_exit
      _
    %632 = vsyncpa [#allocation3], 1
    %s633 = scalar_lea.sflag [#allocation3], 1
    %634 = vsyncpa %s633, 1

</llo_original>
